<compile_context>
chip_gen: v5e
topology: v5e:2x2
jax: 0.10.0
libtpu: 0.0.40
codegen_flags: <defaults>
</compile_context>

<pallas_src>
import functools

import jax
import jax.numpy as jnp
from jax.experimental import pallas as pl
from jax.experimental.pallas import tpu as pltpu


def _flow_kernel(x_ref, w1_ref, b1_ref, wst_ref, bst_ref, z_ref, *,
                 num_layers):
    """Apply `num_layers` affine coupling transforms to one batch tile."""
    half = x_ref.shape[-1] // 2
    mm_dtype = w1_ref.dtype  # matmul operand dtype (bf16 fast path or f32)

    # Keep the two halves live separately: no per-layer concatenate/reslice.
    za = x_ref[:, :half].astype(jnp.float32)   # conditioner half
    zb = x_ref[:, half:].astype(jnp.float32)   # half updated this layer

    for k in range(num_layers):
        # Conditioner MLP: two MXU matmuls (second one N=D wide, s|t fused),
        # f32 accumulation, f32 elementwise (tanh/exp -> EUP, safe on v5e).
        h = jnp.tanh(
            jnp.dot(za.astype(mm_dtype), w1_ref[k],
                    preferred_element_type=jnp.float32) + b1_ref[k])
        st = (jnp.dot(h.astype(mm_dtype), wst_ref[k],
                      preferred_element_type=jnp.float32) + bst_ref[k])
        s = jnp.tanh(st[:, :half])
        t = st[:, half:]

        zb = zb * jnp.exp(s) + t
        # Swap roles for the next layer (standard RealNVP alternation).
        za, zb = zb, za

    # After K layers + K swaps: K even -> (za, zb) = (first, second) halves.
    if num_layers % 2 == 0:
        first, second = za, zb
    else:
        first, second = zb, za
    z_ref[:, :half] = first.astype(z_ref.dtype)
    z_ref[:, half:] = second.astype(z_ref.dtype)


def _round_up(n, m):
    return ((n + m - 1) // m) * m


def _pick_block_b(B):
    # Aim for MXU-filling tiles (<=256 rows) while keeping >=2 grid steps so
    # both v7x TensorCores get a parallel tile; tiles are multiples of 8.
    if B <= 8:
        return B
    return min(256, _round_up(pl.cdiv(B, 2), 8))


def normalizing_flow_forward(x, params, *, block_b=None,
                             matmul_dtype=jnp.bfloat16):
    """Run the fused flow-forward kernel. x: (B, D), features last."""
    B, D = x.shape
    K, half, H = params["w1"].shape
    assert half == D // 2

    # Fuse the s- and t-projections into a single (H, D)-wide matmul/layer.
    wst = jnp.concatenate([params["ws"], params["wt"]], axis=-1)   # (K, H, D)
    bst = jnp.concatenate([params["bs"], params["bt"]], axis=-1)   # (K, 1, D)

    # Cast MXU operands in the wrapper (halves weight DMA bytes for bf16);
    # biases stay f32 (added after the f32-accumulated matmul).
    w1 = params["w1"].astype(matmul_dtype)
    wst = wst.astype(matmul_dtype)
    b1 = params["b1"].astype(jnp.float32)
    bst = bst.astype(jnp.float32)

    if block_b is None:
        block_b = _pick_block_b(B)
    Bp = _round_up(B, block_b)
    xp = x if Bp == B else jnp.pad(x, ((0, Bp - B), (0, 0)))

    kernel = functools.partial(_flow_kernel, num_layers=K)
    full = lambda i: (0, 0, 0)  # weights replicated across batch tiles

    # NOTE(v7x): weight + activation footprint here is ~1-2 MiB, well inside
    # the 32 MiB default scoped VMEM; if K/H/block_b are scaled up, set
    # pltpu.CompilerParams(vmem_limit_bytes=...) with headroom for 64 MiB HW.
    out = pl.pallas_call(
        kernel,
        out_shape=jax.ShapeDtypeStruct((Bp, D), x.dtype),
        grid_spec=pl.GridSpec(
            grid=(Bp // block_b,),
            in_specs=[
                pl.BlockSpec((block_b, D), lambda i: (i, 0)),  # x tile
                pl.BlockSpec((K, half, H), full),              # w1
                pl.BlockSpec((K, 1, H), full),                 # b1
                pl.BlockSpec((K, H, D), full),                 # ws|wt fused
                pl.BlockSpec((K, 1, D), full),                 # bs|bt fused
            ],
            out_specs=pl.BlockSpec((block_b, D), lambda i: (i, 0)),
        ),
        compiler_params=pltpu.CompilerParams(
            dimension_semantics=("parallel",)),
    )(xp, w1, b1, wst, bst)
    return out[:B]


def init_params(key, num_layers, input_dim, hidden):
    """Deterministic synthetic parameters for the coupling transforms."""
    ks = jax.random.split(key, 6)
    half = input_dim // 2
    scale = 0.05
    return {
        "w1": scale * jax.random.normal(ks[0], (num_layers, half, hidden),
                                        jnp.float32),
        "b1": scale * jax.random.normal(ks[1], (num_layers, 1, hidden),
                                        jnp.float32),
        "ws": scale * jax.random.normal(ks[2], (num_layers, hidden, half),
                                        jnp.float32),
        "bs": scale * jax.random.normal(ks[3], (num_layers, 1, half),
                                        jnp.float32),
        "wt": scale * jax.random.normal(ks[4], (num_layers, hidden, half),
                                        jnp.float32),
        "bt": scale * jax.random.normal(ks[5], (num_layers, 1, half),
                                        jnp.float32),
    }


def reference_forward(x, params):
    """Pure-JAX reference of the same transform chain (for verification)."""
    z = x.astype(jnp.float32)
    K, half, _ = params["w1"].shape
    for k in range(K):
        if k % 2 == 0:
            za, zb = z[:, :half], z[:, half:]
        else:
            za, zb = z[:, half:], z[:, :half]
        h = jnp.tanh(za @ params["w1"][k] + params["b1"][k])
        s = jnp.tanh(h @ params["ws"][k] + params["bs"][k])
        t = h @ params["wt"][k] + params["bt"][k]
        zb = zb * jnp.exp(s) + t
        z = (jnp.concatenate([za, zb], -1) if k % 2 == 0
             else jnp.concatenate([zb, za], -1))
    return z


if __name__ == "__main__":
    B, D, H, K = 16, 256, 128, 4  # batch, input_dim, hidden, num transforms

    key = jax.random.PRNGKey(0)
    kx, kp = jax.random.split(key)
    x = jax.random.normal(kx, (B, D), jnp.float32)
    params = init_params(kp, K, D, H)

    z_ref = reference_forward(x, params)

    # Exact path: f32 matmul operands, strict tolerance.
    z_f32 = jax.block_until_ready(
        normalizing_flow_forward(x, params, matmul_dtype=jnp.float32))
    assert z_f32.shape == (B, D)
    assert jnp.allclose(z_f32, z_ref, atol=1e-4, rtol=1e-4), \
        "f32 kernel mismatch vs reference"

    # Fast path: bf16 MXU operands (f32 accumulate, f32 elementwise).
    z_bf16 = jax.block_until_ready(
        normalizing_flow_forward(x, params, matmul_dtype=jnp.bfloat16))
    assert z_bf16.shape == (B, D)
    assert jnp.allclose(z_bf16, z_ref, atol=5e-2, rtol=5e-2), \
        "bf16 kernel mismatch vs reference"

    print("KERNEL_OK")
</pallas_src>

<mosaic_0001>
module attributes {stable_mosaic.version = 11 : i64} {
  func.func @_flow_kernel(%arg0: i32, %arg1: memref<8x256xf32, #tpu.memory_space<vmem>>, %arg2: memref<4x128x128xf32, #tpu.memory_space<vmem>>, %arg3: memref<4x1x128xf32, #tpu.memory_space<vmem>>, %arg4: memref<4x128x256xf32, #tpu.memory_space<vmem>>, %arg5: memref<4x1x256xf32, #tpu.memory_space<vmem>>, %arg6: memref<8x256xf32, #tpu.memory_space<vmem>>) attributes {dimension_semantics = [#tpu.dimension_semantics<parallel>], iteration_bounds = array<i64: 2>, scalar_prefetch = 0 : i64, scratch_operands = 0 : i64, tpu.core_type = #tpu.core_type<tc>, window_params = [{transform_indices = @transform_0, window_bounds = array<i64: 8, 256>}, {pipeline_mode = #tpu.pipeline_mode<synchronous>, transform_indices = @transform_1, window_bounds = array<i64: 4, 128, 128>}, {pipeline_mode = #tpu.pipeline_mode<synchronous>, transform_indices = @transform_2, window_bounds = array<i64: 4, 1, 128>}, {pipeline_mode = #tpu.pipeline_mode<synchronous>, transform_indices = @transform_3, window_bounds = array<i64: 4, 128, 256>}, {pipeline_mode = #tpu.pipeline_mode<synchronous>, transform_indices = @transform_4, window_bounds = array<i64: 4, 1, 256>}, {transform_indices = @transform_5, window_bounds = array<i64: 8, 256>}]} {
    %c0 = arith.constant 0 : index
    %c0_0 = arith.constant 0 : index
    %0 = vector.load %arg1[%c0, %c0_0] : memref<8x256xf32, #tpu.memory_space<vmem>>, vector<8x128xf32>
    %c0_1 = arith.constant 0 : index
    %c128 = arith.constant 128 : index
    %1 = vector.load %arg1[%c0_1, %c128] : memref<8x256xf32, #tpu.memory_space<vmem>>, vector<8x128xf32>
    %c0_2 = arith.constant 0 : index
    %c0_3 = arith.constant 0 : index
    %c0_4 = arith.constant 0 : index
    %2 = vector.load %arg2[%c0_2, %c0_3, %c0_4] : memref<4x128x128xf32, #tpu.memory_space<vmem>>, vector<1x128x128xf32>
    %3 = vector.shape_cast %2 : vector<1x128x128xf32> to vector<128x128xf32>
    %cst = arith.constant dense<0.000000e+00> : vector<8x128xf32>
    %4 = tpu.matmul %0, %3, %cst {dimension_numbers = #tpu.dot_dimension_numbers<[1], [0], [0], [1], [0, 0, 1, 1], [], []>} : vector<8x128xf32>, vector<128x128xf32>, vector<8x128xf32> -> vector<8x128xf32>
    %c0_5 = arith.constant 0 : index
    %c0_6 = arith.constant 0 : index
    %c0_7 = arith.constant 0 : index
    %5 = vector.load %arg3[%c0_5, %c0_6, %c0_7] : memref<4x1x128xf32, #tpu.memory_space<vmem>>, vector<1x1x128xf32>
    %6 = vector.shape_cast %5 : vector<1x1x128xf32> to vector<1x128xf32>
    %7 = vector.broadcast %6 : vector<1x128xf32> to vector<8x128xf32>
    %8 = arith.addf %4, %7 : vector<8x128xf32>
    %9 = math.tanh %8 : vector<8x128xf32>
    %c0_8 = arith.constant 0 : index
    %c0_9 = arith.constant 0 : index
    %c0_10 = arith.constant 0 : index
    %10 = vector.load %arg4[%c0_8, %c0_9, %c0_10] : memref<4x128x256xf32, #tpu.memory_space<vmem>>, vector<1x128x256xf32>
    %11 = vector.shape_cast %10 : vector<1x128x256xf32> to vector<128x256xf32>
    %cst_11 = arith.constant dense<0.000000e+00> : vector<8x256xf32>
    %12 = tpu.matmul %9, %11, %cst_11 {dimension_numbers = #tpu.dot_dimension_numbers<[1], [0], [0], [1], [0, 0, 1, 1], [], []>} : vector<8x128xf32>, vector<128x256xf32>, vector<8x256xf32> -> vector<8x256xf32>
    %c0_12 = arith.constant 0 : index
    %c0_13 = arith.constant 0 : index
    %c0_14 = arith.constant 0 : index
    %13 = vector.load %arg5[%c0_12, %c0_13, %c0_14] : memref<4x1x256xf32, #tpu.memory_space<vmem>>, vector<1x1x256xf32>
    %14 = vector.shape_cast %13 : vector<1x1x256xf32> to vector<1x256xf32>
    %15 = vector.broadcast %14 : vector<1x256xf32> to vector<8x256xf32>
    %16 = arith.addf %12, %15 : vector<8x256xf32>
    %17 = vector.extract_strided_slice %16 {offsets = [0, 0], sizes = [8, 128], strides = [1, 1]} : vector<8x256xf32> to vector<8x128xf32>
    %18 = math.tanh %17 : vector<8x128xf32>
    %19 = vector.extract_strided_slice %16 {offsets = [0, 128], sizes = [8, 128], strides = [1, 1]} : vector<8x256xf32> to vector<8x128xf32>
    %20 = math.exp %18 : vector<8x128xf32>
    %21 = arith.mulf %1, %20 : vector<8x128xf32>
    %22 = arith.addf %21, %19 : vector<8x128xf32>
    %c1 = arith.constant 1 : index
    %c0_15 = arith.constant 0 : index
    %c0_16 = arith.constant 0 : index
    %23 = vector.load %arg2[%c1, %c0_15, %c0_16] : memref<4x128x128xf32, #tpu.memory_space<vmem>>, vector<1x128x128xf32>
    %24 = vector.shape_cast %23 : vector<1x128x128xf32> to vector<128x128xf32>
    %cst_17 = arith.constant dense<0.000000e+00> : vector<8x128xf32>
    %25 = tpu.matmul %22, %24, %cst_17 {dimension_numbers = #tpu.dot_dimension_numbers<[1], [0], [0], [1], [0, 0, 1, 1], [], []>} : vector<8x128xf32>, vector<128x128xf32>, vector<8x128xf32> -> vector<8x128xf32>
    %c1_18 = arith.constant 1 : index
    %c0_19 = arith.constant 0 : index
    %c0_20 = arith.constant 0 : index
    %26 = vector.load %arg3[%c1_18, %c0_19, %c0_20] : memref<4x1x128xf32, #tpu.memory_space<vmem>>, vector<1x1x128xf32>
    %27 = vector.shape_cast %26 : vector<1x1x128xf32> to vector<1x128xf32>
    %28 = vector.broadcast %27 : vector<1x128xf32> to vector<8x128xf32>
    %29 = arith.addf %25, %28 : vector<8x128xf32>
    %30 = math.tanh %29 : vector<8x128xf32>
    %c1_21 = arith.constant 1 : index
    %c0_22 = arith.constant 0 : index
    %c0_23 = arith.constant 0 : index
    %31 = vector.load %arg4[%c1_21, %c0_22, %c0_23] : memref<4x128x256xf32, #tpu.memory_space<vmem>>, vector<1x128x256xf32>
    %32 = vector.shape_cast %31 : vector<1x128x256xf32> to vector<128x256xf32>
    %cst_24 = arith.constant dense<0.000000e+00> : vector<8x256xf32>
    %33 = tpu.matmul %30, %32, %cst_24 {dimension_numbers = #tpu.dot_dimension_numbers<[1], [0], [0], [1], [0, 0, 1, 1], [], []>} : vector<8x128xf32>, vector<128x256xf32>, vector<8x256xf32> -> vector<8x256xf32>
    %c1_25 = arith.constant 1 : index
    %c0_26 = arith.constant 0 : index
    %c0_27 = arith.constant 0 : index
    %34 = vector.load %arg5[%c1_25, %c0_26, %c0_27] : memref<4x1x256xf32, #tpu.memory_space<vmem>>, vector<1x1x256xf32>
    %35 = vector.shape_cast %34 : vector<1x1x256xf32> to vector<1x256xf32>
    %36 = vector.broadcast %35 : vector<1x256xf32> to vector<8x256xf32>
    %37 = arith.addf %33, %36 : vector<8x256xf32>
    %38 = vector.extract_strided_slice %37 {offsets = [0, 0], sizes = [8, 128], strides = [1, 1]} : vector<8x256xf32> to vector<8x128xf32>
    %39 = math.tanh %38 : vector<8x128xf32>
    %40 = vector.extract_strided_slice %37 {offsets = [0, 128], sizes = [8, 128], strides = [1, 1]} : vector<8x256xf32> to vector<8x128xf32>
    %41 = math.exp %39 : vector<8x128xf32>
    %42 = arith.mulf %0, %41 : vector<8x128xf32>
    %43 = arith.addf %42, %40 : vector<8x128xf32>
    %c2 = arith.constant 2 : index
    %c0_28 = arith.constant 0 : index
    %c0_29 = arith.constant 0 : index
    %44 = vector.load %arg2[%c2, %c0_28, %c0_29] : memref<4x128x128xf32, #tpu.memory_space<vmem>>, vector<1x128x128xf32>
    %45 = vector.shape_cast %44 : vector<1x128x128xf32> to vector<128x128xf32>
    %cst_30 = arith.constant dense<0.000000e+00> : vector<8x128xf32>
    %46 = tpu.matmul %43, %45, %cst_30 {dimension_numbers = #tpu.dot_dimension_numbers<[1], [0], [0], [1], [0, 0, 1, 1], [], []>} : vector<8x128xf32>, vector<128x128xf32>, vector<8x128xf32> -> vector<8x128xf32>
    %c2_31 = arith.constant 2 : index
    %c0_32 = arith.constant 0 : index
    %c0_33 = arith.constant 0 : index
    %47 = vector.load %arg3[%c2_31, %c0_32, %c0_33] : memref<4x1x128xf32, #tpu.memory_space<vmem>>, vector<1x1x128xf32>
    %48 = vector.shape_cast %47 : vector<1x1x128xf32> to vector<1x128xf32>
    %49 = vector.broadcast %48 : vector<1x128xf32> to vector<8x128xf32>
    %50 = arith.addf %46, %49 : vector<8x128xf32>
    %51 = math.tanh %50 : vector<8x128xf32>
    %c2_34 = arith.constant 2 : index
    %c0_35 = arith.constant 0 : index
    %c0_36 = arith.constant 0 : index
    %52 = vector.load %arg4[%c2_34, %c0_35, %c0_36] : memref<4x128x256xf32, #tpu.memory_space<vmem>>, vector<1x128x256xf32>
    %53 = vector.shape_cast %52 : vector<1x128x256xf32> to vector<128x256xf32>
    %cst_37 = arith.constant dense<0.000000e+00> : vector<8x256xf32>
    %54 = tpu.matmul %51, %53, %cst_37 {dimension_numbers = #tpu.dot_dimension_numbers<[1], [0], [0], [1], [0, 0, 1, 1], [], []>} : vector<8x128xf32>, vector<128x256xf32>, vector<8x256xf32> -> vector<8x256xf32>
    %c2_38 = arith.constant 2 : index
    %c0_39 = arith.constant 0 : index
    %c0_40 = arith.constant 0 : index
    %55 = vector.load %arg5[%c2_38, %c0_39, %c0_40] : memref<4x1x256xf32, #tpu.memory_space<vmem>>, vector<1x1x256xf32>
    %56 = vector.shape_cast %55 : vector<1x1x256xf32> to vector<1x256xf32>
    %57 = vector.broadcast %56 : vector<1x256xf32> to vector<8x256xf32>
    %58 = arith.addf %54, %57 : vector<8x256xf32>
    %59 = vector.extract_strided_slice %58 {offsets = [0, 0], sizes = [8, 128], strides = [1, 1]} : vector<8x256xf32> to vector<8x128xf32>
    %60 = math.tanh %59 : vector<8x128xf32>
    %61 = vector.extract_strided_slice %58 {offsets = [0, 128], sizes = [8, 128], strides = [1, 1]} : vector<8x256xf32> to vector<8x128xf32>
    %62 = math.exp %60 : vector<8x128xf32>
    %63 = arith.mulf %22, %62 : vector<8x128xf32>
    %64 = arith.addf %63, %61 : vector<8x128xf32>
    %c3 = arith.constant 3 : index
    %c0_41 = arith.constant 0 : index
    %c0_42 = arith.constant 0 : index
    %65 = vector.load %arg2[%c3, %c0_41, %c0_42] : memref<4x128x128xf32, #tpu.memory_space<vmem>>, vector<1x128x128xf32>
    %66 = vector.shape_cast %65 : vector<1x128x128xf32> to vector<128x128xf32>
    %cst_43 = arith.constant dense<0.000000e+00> : vector<8x128xf32>
    %67 = tpu.matmul %64, %66, %cst_43 {dimension_numbers = #tpu.dot_dimension_numbers<[1], [0], [0], [1], [0, 0, 1, 1], [], []>} : vector<8x128xf32>, vector<128x128xf32>, vector<8x128xf32> -> vector<8x128xf32>
    %c3_44 = arith.constant 3 : index
    %c0_45 = arith.constant 0 : index
    %c0_46 = arith.constant 0 : index
    %68 = vector.load %arg3[%c3_44, %c0_45, %c0_46] : memref<4x1x128xf32, #tpu.memory_space<vmem>>, vector<1x1x128xf32>
    %69 = vector.shape_cast %68 : vector<1x1x128xf32> to vector<1x128xf32>
    %70 = vector.broadcast %69 : vector<1x128xf32> to vector<8x128xf32>
    %71 = arith.addf %67, %70 : vector<8x128xf32>
    %72 = math.tanh %71 : vector<8x128xf32>
    %c3_47 = arith.constant 3 : index
    %c0_48 = arith.constant 0 : index
    %c0_49 = arith.constant 0 : index
    %73 = vector.load %arg4[%c3_47, %c0_48, %c0_49] : memref<4x128x256xf32, #tpu.memory_space<vmem>>, vector<1x128x256xf32>
    %74 = vector.shape_cast %73 : vector<1x128x256xf32> to vector<128x256xf32>
    %cst_50 = arith.constant dense<0.000000e+00> : vector<8x256xf32>
    %75 = tpu.matmul %72, %74, %cst_50 {dimension_numbers = #tpu.dot_dimension_numbers<[1], [0], [0], [1], [0, 0, 1, 1], [], []>} : vector<8x128xf32>, vector<128x256xf32>, vector<8x256xf32> -> vector<8x256xf32>
    %c3_51 = arith.constant 3 : index
    %c0_52 = arith.constant 0 : index
    %c0_53 = arith.constant 0 : index
    %76 = vector.load %arg5[%c3_51, %c0_52, %c0_53] : memref<4x1x256xf32, #tpu.memory_space<vmem>>, vector<1x1x256xf32>
    %77 = vector.shape_cast %76 : vector<1x1x256xf32> to vector<1x256xf32>
    %78 = vector.broadcast %77 : vector<1x256xf32> to vector<8x256xf32>
    %79 = arith.addf %75, %78 : vector<8x256xf32>
    %80 = vector.extract_strided_slice %79 {offsets = [0, 0], sizes = [8, 128], strides = [1, 1]} : vector<8x256xf32> to vector<8x128xf32>
    %81 = math.tanh %80 : vector<8x128xf32>
    %82 = vector.extract_strided_slice %79 {offsets = [0, 128], sizes = [8, 128], strides = [1, 1]} : vector<8x256xf32> to vector<8x128xf32>
    %83 = math.exp %81 : vector<8x128xf32>
    %84 = arith.mulf %43, %83 : vector<8x128xf32>
    %85 = arith.addf %84, %82 : vector<8x128xf32>
    %c0_54 = arith.constant 0 : index
    %c0_55 = arith.constant 0 : index
    %86 = vector.load %arg6[%c0_54, %c0_55] : memref<8x256xf32, #tpu.memory_space<vmem>>, vector<8x128xf32>
    tpu.vector_store %arg6[%c0_54, %c0_55], %85 {strides = array<i32>} : memref<8x256xf32, #tpu.memory_space<vmem>>, vector<8x128xf32>,
    %c0_56 = arith.constant 0 : index
    %c128_57 = arith.constant 128 : index
    %87 = vector.load %arg6[%c0_56, %c128_57] : memref<8x256xf32, #tpu.memory_space<vmem>>, vector<8x128xf32>
    tpu.vector_store %arg6[%c0_56, %c128_57], %64 {strides = array<i32>} : memref<8x256xf32, #tpu.memory_space<vmem>>, vector<8x128xf32>,
    return
  }
  func.func @transform_0(%arg0: i32) -> (i32, i32) {
    %c0_i32 = arith.constant 0 : i32
    %c0_i32_0 = arith.constant 0 : i32
    return %arg0, %c0_i32 : i32, i32
  }
  func.func @transform_1(%arg0: i32) -> (i32, i32, i32) {
    %c0_i32 = arith.constant 0 : i32
    %c0_i32_0 = arith.constant 0 : i32
    %c0_i32_1 = arith.constant 0 : i32
    %c0_i32_2 = arith.constant 0 : i32
    return %c0_i32, %c0_i32_0, %c0_i32_1 : i32, i32, i32
  }
  func.func @transform_2(%arg0: i32) -> (i32, i32, i32) {
    %c0_i32 = arith.constant 0 : i32
    %c0_i32_0 = arith.constant 0 : i32
    %c0_i32_1 = arith.constant 0 : i32
    %c0_i32_2 = arith.constant 0 : i32
    return %c0_i32, %c0_i32_0, %c0_i32_1 : i32, i32, i32
  }
  func.func @transform_3(%arg0: i32) -> (i32, i32, i32) {
    %c0_i32 = arith.constant 0 : i32
    %c0_i32_0 = arith.constant 0 : i32
    %c0_i32_1 = arith.constant 0 : i32
    %c0_i32_2 = arith.constant 0 : i32
    return %c0_i32, %c0_i32_0, %c0_i32_1 : i32, i32, i32
  }
  func.func @transform_4(%arg0: i32) -> (i32, i32, i32) {
    %c0_i32 = arith.constant 0 : i32
    %c0_i32_0 = arith.constant 0 : i32
    %c0_i32_1 = arith.constant 0 : i32
    %c0_i32_2 = arith.constant 0 : i32
    return %c0_i32, %c0_i32_0, %c0_i32_1 : i32, i32, i32
  }
  func.func @transform_5(%arg0: i32) -> (i32, i32) {
    %c0_i32 = arith.constant 0 : i32
    %c0_i32_0 = arith.constant 0 : i32
    return %arg0, %c0_i32 : i32, i32
  }
}

</mosaic_0001>

<llo_original>
// kernel: tpu_custom_call.1
$region0: #{tpu_custom_call.1}
  #allocation0 [shape = 'u32[]', space=smem, size = 0x4, offset = 0x4, fixed_abs, tag = 'smem constant byte address 0x4 - core index']
  #allocation1 [shape = 'u32[72,128]{1,0:T(1,128)}', space=vmem, size = 0x9000, scoped, tag = 'internal scratch']
  %s0 = inlined_call_operand.hbm [shape: f32[16,256], index: 0, kind: input, shape index: {}]
  %s1 = inlined_call_operand.hbm [shape: f32[4,128,128], index: 1, kind: input, shape index: {}]
  %s2 = inlined_call_operand.hbm [shape: f32[4,1,128], index: 2, kind: input, shape index: {}]
  %s3 = inlined_call_operand.hbm [shape: f32[4,128,256], index: 3, kind: input, shape index: {}]
  %s4 = inlined_call_operand.hbm [shape: f32[4,1,256], index: 4, kind: input, shape index: {}]
  %s5 = inlined_call_operand.hbm [shape: f32[16,256], index: 5, kind: output, shape index: {}]
  %s6 = sld [smem:[#allocation0]]
  $region73: #{tpu_custom_call.1} parent=0
    _
  %s8 = ssub.s32 1, %s6
  %s9 = scalar_select 0, %s8, %s6
  $region1: #{tpu_custom_call.1} parent=0
    #allocation2 [shape = 'u8[16384]{0}', space=vmem, size = 0x4000, scoped, tag = 'input window, operand 0']
    #allocation3 [shape = 's32[2]{0}', space=sflag, size = 0x8, scoped, tag = 'scoped memory for tpu_custom_call.1']
    #allocation4 [shape = 's32[2]{0}', space=sflag, size = 0x8, scoped, tag = 'scoped memory for tpu_custom_call.1']
    #allocation5 [shape = 'u8[262144]{0}', space=vmem, size = 0x40000, scoped, tag = 'input window, operand 1, single buffered']
    #allocation6 [shape = 's32[1]{0}', space=sflag, size = 0x4, scoped, tag = 'scoped memory for tpu_custom_call.1']
    #allocation7 [shape = 'u8[2048]{0}', space=vmem, size = 0x800, scoped, tag = 'input window, operand 2, single buffered']
    #allocation8 [shape = 'u8[524288]{0}', space=vmem, size = 0x80000, scoped, tag = 'input window, operand 3, single buffered']
    #allocation9 [shape = 's32[1]{0}', space=sflag, size = 0x4, scoped, tag = 'scoped memory for tpu_custom_call.1']
    #allocation10 [shape = 'u8[4096]{0}', space=vmem, size = 0x1000, scoped, tag = 'input window, operand 4, single buffered']
    #allocation11 [shape = 'u8[16384]{0}', space=vmem, size = 0x4000, scoped, tag = 'output window, operand 0']
    %10 = vsyncpa [#allocation3], 0
    %s11 = scalar_lea.sflag [#allocation3], 1
    %12 = vsyncpa %s11, 0
    %13 = vsyncpa [#allocation6], 0
    %14 = vsyncpa [#allocation9], 0
    %15 = vsyncpa [#allocation4], 0
    %s16 = scalar_lea.sflag [#allocation4], 1
    %17 = vsyncpa %s16, 0
    loop: start=0, step=1, limit=4
    $region2: #{tpu_custom_call.1} parent=1 // loop_pre_header
      _
    $region3: #{tpu_custom_call.1} parent=1 // loop_header
      %s19 = sphi 0, %s23
      %p20 = scmp.ge.s32.totalorder %s19, 4
      %s29 = sphi 0, %s31
      %s32 = sphi 0, %s29
      %s33 = sphi 0, %s32
      %s49 = sphi 0, %s33
      %s53 = sphi 0, %s53
      %s55 = sphi 0, %s53
      %s56 = sphi 0, %s55
      %s70 = sphi 0, %s56
      %s74 = sphi 0, %s74
      %s76 = sphi 0, %s74
      %s77 = sphi 0, %s76
      %s91 = sphi 0, %s77
      %s95 = sphi 0, %s95
      %s97 = sphi 0, %s95
      %s98 = sphi 0, %s97
      %s112 = sphi 0, %s98
      %s116 = sphi 0, %s116
      %s118 = sphi 0, %s116
      %s119 = sphi 0, %s118
      %s133 = sphi 0, %s119
      %s139 = sphi 0, %s141
      %s142 = sphi 0, %s139
      %s143 = sphi 0, %s142
      %s159 = sphi 0, %s143
    $region4: #{tpu_custom_call.1} parent=1 // loop_header_branch
      %22 = sbr.rel (%p20) target = $region8
    $region5: #{tpu_custom_call.1} parent=1 // loop_body
      %s24 = ssub.s32 %s19, 1
      %s25 = ssub.s32 %s19, 2
      %s26 = sadd.s32 %s19, 1
      %s27 = ssub.s32 %s19, %s26
      %p28 = scmp.eq.s32.totalorder %s27, 0
      %s30 = sadd.s32 %s29, 1
      %s31 = scalar_select %p28, %s29, %s30
      %p34 = pneg %p28
      %p35 = scmp.eq.s32.totalorder %s19, 1
      %p36 = por %p34, %p35
      %p37 = scmp.ne.s32.totalorder %s29, %s32
      %p38 = scmp.eq.s32.totalorder %s19, 0
      %p39 = por %p37, %p38
      %p40 = scmp.ne.s32.totalorder %s29, %s32
      %p41 = scmp.eq.s32.totalorder %s24, 1
      %p42 = por %p40, %p41
      %p43 = scmp.ne.s32.totalorder %s32, %s33
      %p44 = scmp.eq.s32.totalorder %s24, 0
      %p45 = por %p43, %p44
      %p46 = scmp.ne.s32.totalorder %s32, %s33
      %p47 = scmp.eq.s32.totalorder %s25, 1
      %p48 = por %p46, %p47
      %p50 = scmp.ne.s32.totalorder %s33, %s49
      %p51 = scmp.eq.s32.totalorder %s25, 0
      %p52 = por %p50, %p51
      %s54 = sadd.s32 %s53, 1
      %p57 = scmp.eq.s32.totalorder %s19, 1
      %p58 = scmp.ne.s32.totalorder %s53, %s55
      %p59 = scmp.eq.s32.totalorder %s19, 0
      %p60 = por %p58, %p59
      %p61 = scmp.ne.s32.totalorder %s53, %s55
      %p62 = scmp.eq.s32.totalorder %s24, 1
      %p63 = por %p61, %p62
      %p64 = scmp.ne.s32.totalorder %s55, %s56
      %p65 = scmp.eq.s32.totalorder %s24, 0
      %p66 = por %p64, %p65
      %p67 = scmp.ne.s32.totalorder %s55, %s56
      %p68 = scmp.eq.s32.totalorder %s25, 1
      %p69 = por %p67, %p68
      %p71 = scmp.ne.s32.totalorder %s56, %s70
      %p72 = scmp.eq.s32.totalorder %s25, 0
      %p73 = por %p71, %p72
      %s75 = sadd.s32 %s74, 1
      %p78 = scmp.eq.s32.totalorder %s19, 1
      %p79 = scmp.ne.s32.totalorder %s74, %s76
      %p80 = scmp.eq.s32.totalorder %s19, 0
      %p81 = por %p79, %p80
      %p82 = scmp.ne.s32.totalorder %s74, %s76
      %p83 = scmp.eq.s32.totalorder %s24, 1
      %p84 = por %p82, %p83
      %p85 = scmp.ne.s32.totalorder %s76, %s77
      %p86 = scmp.eq.s32.totalorder %s24, 0
      %p87 = por %p85, %p86
      %p88 = scmp.ne.s32.totalorder %s76, %s77
      %p89 = scmp.eq.s32.totalorder %s25, 1
      %p90 = por %p88, %p89
      %p92 = scmp.ne.s32.totalorder %s77, %s91
      %p93 = scmp.eq.s32.totalorder %s25, 0
      %p94 = por %p92, %p93
      %s96 = sadd.s32 %s95, 1
      %p99 = scmp.eq.s32.totalorder %s19, 1
      %p100 = scmp.ne.s32.totalorder %s95, %s97
      %p101 = scmp.eq.s32.totalorder %s19, 0
      %p102 = por %p100, %p101
      %p103 = scmp.ne.s32.totalorder %s95, %s97
      %p104 = scmp.eq.s32.totalorder %s24, 1
      %p105 = por %p103, %p104
      %p106 = scmp.ne.s32.totalorder %s97, %s98
      %p107 = scmp.eq.s32.totalorder %s24, 0
      %p108 = por %p106, %p107
      %p109 = scmp.ne.s32.totalorder %s97, %s98
      %p110 = scmp.eq.s32.totalorder %s25, 1
      %p111 = por %p109, %p110
      %p113 = scmp.ne.s32.totalorder %s98, %s112
      %p114 = scmp.eq.s32.totalorder %s25, 0
      %p115 = por %p113, %p114
      %s117 = sadd.s32 %s116, 1
      %p120 = scmp.eq.s32.totalorder %s19, 1
      %p121 = scmp.ne.s32.totalorder %s116, %s118
      %p122 = scmp.eq.s32.totalorder %s19, 0
      %p123 = por %p121, %p122
      %p124 = scmp.ne.s32.totalorder %s116, %s118
      %p125 = scmp.eq.s32.totalorder %s24, 1
      %p126 = por %p124, %p125
      %p127 = scmp.ne.s32.totalorder %s118, %s119
      %p128 = scmp.eq.s32.totalorder %s24, 0
      %p129 = por %p127, %p128
      %p130 = scmp.ne.s32.totalorder %s118, %s119
      %p131 = scmp.eq.s32.totalorder %s25, 1
      %p132 = por %p130, %p131
      %p134 = scmp.ne.s32.totalorder %s119, %s133
      %p135 = scmp.eq.s32.totalorder %s25, 0
      %p136 = por %p134, %p135
      %s137 = ssub.s32 %s19, %s26
      %p138 = scmp.eq.s32.totalorder %s137, 0
      %s140 = sadd.s32 %s139, 1
      %s141 = scalar_select %p138, %s139, %s140
      %p144 = pneg %p138
      %p145 = scmp.eq.s32.totalorder %s19, 1
      %p146 = por %p144, %p145
      %p147 = scmp.ne.s32.totalorder %s139, %s142
      %p148 = scmp.eq.s32.totalorder %s19, 0
      %p149 = por %p147, %p148
      %p150 = scmp.ne.s32.totalorder %s139, %s142
      %p151 = scmp.eq.s32.totalorder %s24, 1
      %p152 = por %p150, %p151
      %p153 = scmp.ne.s32.totalorder %s142, %s143
      %p154 = scmp.eq.s32.totalorder %s24, 0
      %p155 = por %p153, %p154
      %p156 = scmp.ne.s32.totalorder %s142, %s143
      %p157 = scmp.eq.s32.totalorder %s25, 1
      %p158 = por %p156, %p157
      %p160 = scmp.ne.s32.totalorder %s143, %s159
      %p161 = scmp.eq.s32.totalorder %s25, 0
      %p162 = por %p160, %p161
      %p163 = scmp.le.s32.totalorder 1, %s19
      %p164 = scmp.lt.s32.totalorder %s19, 3
      %p165 = pnand %p163, %p164
      %p166 = pneg %p165
      // Predicated region
      $region9: #{tpu_custom_call.1} parent=5 // pred_check
        _
      $region10: #{tpu_custom_call.1} parent=5 // pred_check_branch
        %168 = sbr.rel (%p165) target = $region12
      $region11: #{tpu_custom_call.1} parent=5 // pred_region
        %s169 = ssub.s32 %s19, 1
        // Predicated region
        $region13: #{tpu_custom_call.1} parent=11 // pred_check
          %p170 = pneg %p66
        $region14: #{tpu_custom_call.1} parent=11 // pred_check_branch
          %172 = sbr.rel (%p170) target = $region16
        $region15: #{tpu_custom_call.1} parent=11 // pred_region
          %174 = vsyncadd [#allocation6], 0
          %s175 = sshll.u32 %s1, 4
          %s176 = int_to_ptr.hbm [resolvable:$true] %s175
          %s177 = sshll.u32 [#allocation5], 4
          %s178 = int_to_ptr.vmem [resolvable:$true] %s177
          %183 = dma.hbm_to_vmem [thread:$0]  %s176, 8192, %s178, [#allocation6], 128, 128, 8
        $region16: #{tpu_custom_call.1} parent=11 // pred_fallthru
          _
        // Predicated region
        $region17: #{tpu_custom_call.1} parent=11 // pred_check
          %p184 = pneg %p87
        $region18: #{tpu_custom_call.1} parent=11 // pred_check_branch
          %186 = sbr.rel (%p184) target = $region20
        $region19: #{tpu_custom_call.1} parent=11 // pred_region
          %188 = vsyncadd [#allocation6], 0
          %s189 = sshll.u32 %s2, 4
          %s190 = int_to_ptr.hbm [resolvable:$true] %s189
          %s191 = sshll.u32 [#allocation7], 4
          %s192 = int_to_ptr.vmem [resolvable:$true] %s191
          %197 = dma.hbm_to_vmem [thread:$0]  %s190, 64, %s192, [#allocation6], 16, 16, 1
        $region20: #{tpu_custom_call.1} parent=11 // pred_fallthru
          _
        // Predicated region
        $region21: #{tpu_custom_call.1} parent=11 // pred_check
          %p198 = pneg %p108
        $region22: #{tpu_custom_call.1} parent=11 // pred_check_branch
          %200 = sbr.rel (%p198) target = $region24
        $region23: #{tpu_custom_call.1} parent=11 // pred_region
          %202 = vsyncadd [#allocation9], 0
          %s203 = sshll.u32 %s3, 4
          %s204 = int_to_ptr.hbm [resolvable:$true] %s203
          %s205 = sshll.u32 [#allocation8], 4
          %s206 = int_to_ptr.vmem [resolvable:$true] %s205
          %211 = dma.hbm_to_vmem [thread:$0]  %s204, 16384, %s206, [#allocation9], 256, 256, 16
        $region24: #{tpu_custom_call.1} parent=11 // pred_fallthru
          _
        // Predicated region
        $region25: #{tpu_custom_call.1} parent=11 // pred_check
          %p212 = pneg %p129
        $region26: #{tpu_custom_call.1} parent=11 // pred_check_branch
          %214 = sbr.rel (%p212) target = $region28
        $region27: #{tpu_custom_call.1} parent=11 // pred_region
          %216 = vsyncadd [#allocation9], 0
          %s217 = sshll.u32 %s4, 4
          %s218 = int_to_ptr.hbm [resolvable:$true] %s217
          %s219 = sshll.u32 [#allocation10], 4
          %s220 = int_to_ptr.vmem [resolvable:$true] %s219
          %225 = dma.hbm_to_vmem [thread:$0]  %s218, 128, %s220, [#allocation9], 32, 32, 2
        $region28: #{tpu_custom_call.1} parent=11 // pred_fallthru
          _
      $region12: #{tpu_custom_call.1} parent=5 // pred_fallthru
        _
      %p226 = scmp.lt.s32.totalorder %s19, 2
      // Predicated region
      $region29: #{tpu_custom_call.1} parent=5 // pred_check
        %p227 = pneg %p226
      $region30: #{tpu_custom_call.1} parent=5 // pred_check_branch
        %229 = sbr.rel (%p227) target = $region32
      $region31: #{tpu_custom_call.1} parent=5 // pred_region
        // Predicated region
        $region33: #{tpu_custom_call.1} parent=31 // pred_check
          %p230 = pneg %p39
        $region34: #{tpu_custom_call.1} parent=31 // pred_check_branch
          %232 = sbr.rel (%p230) target = $region36
        $region35: #{tpu_custom_call.1} parent=31 // pred_region
          %s233 = sand.u32 %s29, 1
          %s234 = scalar_lea.sflag [#allocation3], %s233
          %s235 = sand.u32 %s29, 1
          %s236 = smul.addr %s235, 16
          %s237 = scalar_lea.vmem [#allocation2], %s236
          %239 = vsyncadd %s234, 0
          %s240 = smul.addr %s19, 2
          %s241 = smul.addr %s240, 8
          %s242 = scalar_lea.hbm %s0, %s241
          %s244 = sshll.u32 %s242, 4
          %s245 = int_to_ptr.hbm [resolvable:$true] %s244
          %s246 = sshll.u32 %s237, 4
          %s247 = int_to_ptr.vmem [resolvable:$true] %s246
          %249 = dma.hbm_to_vmem [thread:$0]  %s245, 256, %s247, %s234
        $region36: #{tpu_custom_call.1} parent=31 // pred_fallthru
          _
      $region32: #{tpu_custom_call.1} parent=5 // pred_fallthru
        _
      %p250 = scmp.le.s32.totalorder 1, %s19
      %p251 = scmp.lt.s32.totalorder %s19, 3
      %p252 = pnand %p250, %p251
      %p253 = pneg %p252
      // Predicated region
      $region37: #{tpu_custom_call.1} parent=5 // pred_check
        _
      $region38: #{tpu_custom_call.1} parent=5 // pred_check_branch
        %255 = sbr.rel (%p252) target = $region40
      $region39: #{tpu_custom_call.1} parent=5 // pred_region
        %s256 = ssub.s32 %s19, 1
        %s257 = sand.u32 %s32, 1
        %s258 = scalar_lea.sflag [#allocation3], %s257
        %s259 = sand.u32 %s32, 1
        %s260 = smul.addr %s259, 16
        %s261 = scalar_lea.vmem [#allocation2], %s260
        // Predicated region
        $region41: #{tpu_custom_call.1} parent=39 // pred_check
          %p262 = pneg %p45
        $region42: #{tpu_custom_call.1} parent=39 // pred_check_branch
          %264 = sbr.rel (%p262) target = $region44
        $region43: #{tpu_custom_call.1} parent=39 // pred_region
          %266 = dma.done %s258, 256
        $region44: #{tpu_custom_call.1} parent=39 // pred_fallthru
          _
        // Predicated region
        $region45: #{tpu_custom_call.1} parent=39 // pred_check
          %p267 = pneg %p66
        $region46: #{tpu_custom_call.1} parent=39 // pred_check_branch
          %269 = sbr.rel (%p267) target = $region48
        $region47: #{tpu_custom_call.1} parent=39 // pred_region
          %271 = dma.done [#allocation6], 8192
        $region48: #{tpu_custom_call.1} parent=39 // pred_fallthru
          _
        // Predicated region
        $region49: #{tpu_custom_call.1} parent=39 // pred_check
          %p272 = pneg %p87
        $region50: #{tpu_custom_call.1} parent=39 // pred_check_branch
          %274 = sbr.rel (%p272) target = $region52
        $region51: #{tpu_custom_call.1} parent=39 // pred_region
          %276 = dma.done [#allocation6], 64
        $region52: #{tpu_custom_call.1} parent=39 // pred_fallthru
          _
        // Predicated region
        $region53: #{tpu_custom_call.1} parent=39 // pred_check
          %p277 = pneg %p108
        $region54: #{tpu_custom_call.1} parent=39 // pred_check_branch
          %279 = sbr.rel (%p277) target = $region56
        $region55: #{tpu_custom_call.1} parent=39 // pred_region
          %281 = dma.done [#allocation9], 16384
        $region56: #{tpu_custom_call.1} parent=39 // pred_fallthru
          _
        // Predicated region
        $region57: #{tpu_custom_call.1} parent=39 // pred_check
          %p282 = pneg %p129
        $region58: #{tpu_custom_call.1} parent=39 // pred_check_branch
          %284 = sbr.rel (%p282) target = $region60
        $region59: #{tpu_custom_call.1} parent=39 // pred_region
          %286 = dma.done [#allocation9], 128
        $region60: #{tpu_custom_call.1} parent=39 // pred_fallthru
          _
        %s287 = sand.u32 %s32, 1
        %s288 = scalar_lea.sflag [#allocation3], %s287
        %s289 = sand.u32 %s32, 1
        %s290 = smul.addr %s289, 16
        %s291 = scalar_lea.vmem [#allocation2], %s290
        %p292 = pneg %p45
        %p293 = pneg %p42
        %p294 = pneg %p66
        %p295 = pneg %p63
        %p296 = pneg %p87
        %p297 = pneg %p84
        %p298 = pneg %p108
        %p299 = pneg %p105
        %p300 = pneg %p129
        %p301 = pneg %p126
        %p302 = pneg %p155
        %p303 = pneg %p152
        %s304 = sand.u32 %s142, 1
        %s305 = scalar_lea.sflag [#allocation4], %s304
        %s306 = sand.u32 %s142, 1
        %s307 = smul.addr %s306, 16
        %s308 = scalar_lea.vmem [#allocation11], %s307
        %v309 = vld [vmem:[%s261] sm:$0xff]
        %v310 = vld [vmem:[%s261 + $0x8] sm:$0xff]
        %v311 = vld [vmem:[#allocation5] sm:$0xff]
        %v312 = vld [vmem:[#allocation5 + $0x8] sm:$0xff]
        %v313 = vld [vmem:[#allocation5 + $0x10] sm:$0xff]
        %v314 = vld [vmem:[#allocation5 + $0x18] sm:$0xff]
        %v315 = vld [vmem:[#allocation5 + $0x20] sm:$0xff]
        %v316 = vld [vmem:[#allocation5 + $0x28] sm:$0xff]
        %v317 = vld [vmem:[#allocation5 + $0x30] sm:$0xff]
        %v318 = vld [vmem:[#allocation5 + $0x38] sm:$0xff]
        %v319 = vld [vmem:[#allocation5 + $0x40] sm:$0xff]
        %v320 = vld [vmem:[#allocation5 + $0x48] sm:$0xff]
        %v321 = vld [vmem:[#allocation5 + $0x50] sm:$0xff]
        %v322 = vld [vmem:[#allocation5 + $0x58] sm:$0xff]
        %v323 = vld [vmem:[#allocation5 + $0x60] sm:$0xff]
        %v324 = vld [vmem:[#allocation5 + $0x68] sm:$0xff]
        %v325 = vld [vmem:[#allocation5 + $0x70] sm:$0xff]
        %v326 = vld [vmem:[#allocation5 + $0x78] sm:$0xff]
        %v327 = vld [vmem:[#allocation7] sm:$0x1]
        %v329 = vperm.slane %v327, 0
        %331 = vmatpush.msra.mxu0 %v326
        %332 = vmatpush.msra.mxu0 %v325
        %333 = vmatpush.msra.mxu0 %v324
        %334 = vmatpush.msra.mxu0 %v323
        %335 = vmatpush.msra.mxu0 %v322
        %336 = vmatpush.msra.mxu0 %v321
        %337 = vmatpush.msra.mxu0 %v320
        %338 = vmatpush.msra.mxu0 %v319
        %339 = vmatpush.msra.mxu0 %v318
        %340 = vmatpush.msra.mxu0 %v317
        %341 = vmatpush.msra.mxu0 %v316
        %342 = vmatpush.msra.mxu0 %v315
        %343 = vmatpush.msra.mxu0 %v314
        %344 = vmatpush.msra.mxu0 %v313
        %345 = vmatpush.msra.mxu0 %v312
        %346 = vmatpush.msra.mxu0 %v311
        %347 = vmatmul.f32.gmra.mxu0 %v309
        %v348 = vpop.f32.mrf.mxu0
        %v349 = vadd.f32 %v329, %v348
        %350 = vdwg.mxu0
        %v351 = vtanh.pop %v349
        %v352 = vld [vmem:[#allocation8] sm:$0xff]
        %v353 = vld [vmem:[#allocation8 + $0x8] sm:$0xff]
        %v354 = vld [vmem:[#allocation8 + $0x10] sm:$0xff]
        %v355 = vld [vmem:[#allocation8 + $0x18] sm:$0xff]
        %v356 = vld [vmem:[#allocation8 + $0x20] sm:$0xff]
        %v357 = vld [vmem:[#allocation8 + $0x28] sm:$0xff]
        %v358 = vld [vmem:[#allocation8 + $0x30] sm:$0xff]
        %v359 = vld [vmem:[#allocation8 + $0x38] sm:$0xff]
        %v360 = vld [vmem:[#allocation8 + $0x40] sm:$0xff]
        %v361 = vld [vmem:[#allocation8 + $0x48] sm:$0xff]
        %v362 = vld [vmem:[#allocation8 + $0x50] sm:$0xff]
        %v363 = vld [vmem:[#allocation8 + $0x58] sm:$0xff]
        %v364 = vld [vmem:[#allocation8 + $0x60] sm:$0xff]
        %v365 = vld [vmem:[#allocation8 + $0x68] sm:$0xff]
        %v366 = vld [vmem:[#allocation8 + $0x70] sm:$0xff]
        %v367 = vld [vmem:[#allocation8 + $0x78] sm:$0xff]
        %v368 = vld [vmem:[#allocation8 + $0x80] sm:$0xff]
        %v369 = vld [vmem:[#allocation8 + $0x88] sm:$0xff]
        %v370 = vld [vmem:[#allocation8 + $0x90] sm:$0xff]
        %v371 = vld [vmem:[#allocation8 + $0x98] sm:$0xff]
        %v372 = vld [vmem:[#allocation8 + $0xa0] sm:$0xff]
        %v373 = vld [vmem:[#allocation8 + $0xa8] sm:$0xff]
        %v374 = vld [vmem:[#allocation8 + $0xb0] sm:$0xff]
        %v375 = vld [vmem:[#allocation8 + $0xb8] sm:$0xff]
        %v376 = vld [vmem:[#allocation8 + $0xc0] sm:$0xff]
        %v377 = vld [vmem:[#allocation8 + $0xc8] sm:$0xff]
        %v378 = vld [vmem:[#allocation8 + $0xd0] sm:$0xff]
        %v379 = vld [vmem:[#allocation8 + $0xd8] sm:$0xff]
        %v380 = vld [vmem:[#allocation8 + $0xe0] sm:$0xff]
        %v381 = vld [vmem:[#allocation8 + $0xe8] sm:$0xff]
        %v382 = vld [vmem:[#allocation8 + $0xf0] sm:$0xff]
        %v383 = vld [vmem:[#allocation8 + $0xf8] sm:$0xff]
        %v384 = vld [vmem:[#allocation10] sm:$0x3]
        %v386 = vperm.slane %v384, 0
        %v387 = vperm.slane %v384, 1
        %390 = vmatpush.msra.mxu0 %v382
        %391 = vmatpush.msra.mxu0 %v380
        %392 = vmatpush.msra.mxu0 %v378
        %393 = vmatpush.msra.mxu0 %v376
        %394 = vmatpush.msra.mxu0 %v374
        %395 = vmatpush.msra.mxu0 %v372
        %396 = vmatpush.msra.mxu0 %v370
        %397 = vmatpush.msra.mxu0 %v368
        %398 = vmatpush.msra.mxu0 %v366
        %399 = vmatpush.msra.mxu0 %v364
        %400 = vmatpush.msra.mxu0 %v362
        %401 = vmatpush.msra.mxu0 %v360
        %402 = vmatpush.msra.mxu0 %v358
        %403 = vmatpush.msra.mxu0 %v356
        %404 = vmatpush.msra.mxu0 %v354
        %405 = vmatpush.msra.mxu0 %v352
        %406 = vmatmul.f32.gmra.mxu0 %v351
        %v407 = vpop.f32.mrf.mxu0
        %v408 = vadd.f32 %v386, %v407
        %409 = vdwg.mxu0
        %410 = vmatpush.msra.mxu0 %v383
        %411 = vmatpush.msra.mxu0 %v381
        %412 = vmatpush.msra.mxu0 %v379
        %413 = vmatpush.msra.mxu0 %v377
        %414 = vmatpush.msra.mxu0 %v375
        %415 = vmatpush.msra.mxu0 %v373
        %416 = vmatpush.msra.mxu0 %v371
        %417 = vmatpush.msra.mxu0 %v369
        %418 = vmatpush.msra.mxu0 %v367
        %419 = vmatpush.msra.mxu0 %v365
        %420 = vmatpush.msra.mxu0 %v363
        %421 = vmatpush.msra.mxu0 %v361
        %422 = vmatpush.msra.mxu0 %v359
        %423 = vmatpush.msra.mxu0 %v357
        %424 = vmatpush.msra.mxu0 %v355
        %425 = vmatpush.msra.mxu0 %v353
        %426 = vmatmul.f32.gmra.mxu0 %v351
        %v427 = vpop.f32.mrf.mxu0
        %v428 = vadd.f32 %v387, %v427
        %429 = vdwg.mxu0
        %v430 = vtanh.pop %v408
        %v431 = vmul.f32 %v430, 1.442695
        %v432 = vpow.pop %v431
        %v433 = vmul.f32 %v310, %v432
        %v434 = vadd.f32 %v433, %v428
        %s435 = scalar_lea.vmem [#allocation5], 128
        %v436 = vld [vmem:[%s435] sm:$0xff]
        %v437 = vld [vmem:[%s435 + $0x8] sm:$0xff]
        %v438 = vld [vmem:[%s435 + $0x10] sm:$0xff]
        %v439 = vld [vmem:[%s435 + $0x18] sm:$0xff]
        %v440 = vld [vmem:[%s435 + $0x20] sm:$0xff]
        %v441 = vld [vmem:[%s435 + $0x28] sm:$0xff]
        %v442 = vld [vmem:[%s435 + $0x30] sm:$0xff]
        %v443 = vld [vmem:[%s435 + $0x38] sm:$0xff]
        %v444 = vld [vmem:[%s435 + $0x40] sm:$0xff]
        %v445 = vld [vmem:[%s435 + $0x48] sm:$0xff]
        %v446 = vld [vmem:[%s435 + $0x50] sm:$0xff]
        %v447 = vld [vmem:[%s435 + $0x58] sm:$0xff]
        %v448 = vld [vmem:[%s435 + $0x60] sm:$0xff]
        %v449 = vld [vmem:[%s435 + $0x68] sm:$0xff]
        %v450 = vld [vmem:[%s435 + $0x70] sm:$0xff]
        %v451 = vld [vmem:[%s435 + $0x78] sm:$0xff]
        %s452 = scalar_lea.vmem [#allocation7], 1
        %v453 = vld [vmem:[%s452] sm:$0x1]
        %v455 = vperm.slane %v453, 0
        %457 = vmatpush.msra.mxu0 %v451
        %458 = vmatpush.msra.mxu0 %v450
        %459 = vmatpush.msra.mxu0 %v449
        %460 = vmatpush.msra.mxu0 %v448
        %461 = vmatpush.msra.mxu0 %v447
        %462 = vmatpush.msra.mxu0 %v446
        %463 = vmatpush.msra.mxu0 %v445
        %464 = vmatpush.msra.mxu0 %v444
        %465 = vmatpush.msra.mxu0 %v443
        %466 = vmatpush.msra.mxu0 %v442
        %467 = vmatpush.msra.mxu0 %v441
        %468 = vmatpush.msra.mxu0 %v440
        %469 = vmatpush.msra.mxu0 %v439
        %470 = vmatpush.msra.mxu0 %v438
        %471 = vmatpush.msra.mxu0 %v437
        %472 = vmatpush.msra.mxu0 %v436
        %473 = vmatmul.f32.gmra.mxu0 %v434
        %v474 = vpop.f32.mrf.mxu0
        %v475 = vadd.f32 %v455, %v474
        %476 = vdwg.mxu0
        %v477 = vtanh.pop %v475
        %s478 = scalar_lea.vmem [#allocation8], 256
        %v479 = vld [vmem:[%s478] sm:$0xff]
        %v480 = vld [vmem:[%s478 + $0x8] sm:$0xff]
        %v481 = vld [vmem:[%s478 + $0x10] sm:$0xff]
        %v482 = vld [vmem:[%s478 + $0x18] sm:$0xff]
        %v483 = vld [vmem:[%s478 + $0x20] sm:$0xff]
        %v484 = vld [vmem:[%s478 + $0x28] sm:$0xff]
        %v485 = vld [vmem:[%s478 + $0x30] sm:$0xff]
        %v486 = vld [vmem:[%s478 + $0x38] sm:$0xff]
        %v487 = vld [vmem:[%s478 + $0x40] sm:$0xff]
        %v488 = vld [vmem:[%s478 + $0x48] sm:$0xff]
        %v489 = vld [vmem:[%s478 + $0x50] sm:$0xff]
        %v490 = vld [vmem:[%s478 + $0x58] sm:$0xff]
        %v491 = vld [vmem:[%s478 + $0x60] sm:$0xff]
        %v492 = vld [vmem:[%s478 + $0x68] sm:$0xff]
        %v493 = vld [vmem:[%s478 + $0x70] sm:$0xff]
        %v494 = vld [vmem:[%s478 + $0x78] sm:$0xff]
        %v495 = vld [vmem:[%s478 + $0x80] sm:$0xff]
        %v496 = vld [vmem:[%s478 + $0x88] sm:$0xff]
        %v497 = vld [vmem:[%s478 + $0x90] sm:$0xff]
        %v498 = vld [vmem:[%s478 + $0x98] sm:$0xff]
        %v499 = vld [vmem:[%s478 + $0xa0] sm:$0xff]
        %v500 = vld [vmem:[%s478 + $0xa8] sm:$0xff]
        %v501 = vld [vmem:[%s478 + $0xb0] sm:$0xff]
        %v502 = vld [vmem:[%s478 + $0xb8] sm:$0xff]
        %v503 = vld [vmem:[%s478 + $0xc0] sm:$0xff]
        %v504 = vld [vmem:[%s478 + $0xc8] sm:$0xff]
        %v505 = vld [vmem:[%s478 + $0xd0] sm:$0xff]
        %v506 = vld [vmem:[%s478 + $0xd8] sm:$0xff]
        %v507 = vld [vmem:[%s478 + $0xe0] sm:$0xff]
        %v508 = vld [vmem:[%s478 + $0xe8] sm:$0xff]
        %v509 = vld [vmem:[%s478 + $0xf0] sm:$0xff]
        %v510 = vld [vmem:[%s478 + $0xf8] sm:$0xff]
        %s511 = scalar_lea.vmem [#allocation10], 2
        %v512 = vld [vmem:[%s511] sm:$0x3]
        %v514 = vperm.slane %v512, 0
        %v515 = vperm.slane %v512, 1
        %518 = vmatpush.msra.mxu0 %v509
        %519 = vmatpush.msra.mxu0 %v507
        %520 = vmatpush.msra.mxu0 %v505
        %521 = vmatpush.msra.mxu0 %v503
        %522 = vmatpush.msra.mxu0 %v501
        %523 = vmatpush.msra.mxu0 %v499
        %524 = vmatpush.msra.mxu0 %v497
        %525 = vmatpush.msra.mxu0 %v495
        %526 = vmatpush.msra.mxu0 %v493
        %527 = vmatpush.msra.mxu0 %v491
        %528 = vmatpush.msra.mxu0 %v489
        %529 = vmatpush.msra.mxu0 %v487
        %530 = vmatpush.msra.mxu0 %v485
        %531 = vmatpush.msra.mxu0 %v483
        %532 = vmatpush.msra.mxu0 %v481
        %533 = vmatpush.msra.mxu0 %v479
        %534 = vmatmul.f32.gmra.mxu0 %v477
        %v535 = vpop.f32.mrf.mxu0
        %v536 = vadd.f32 %v514, %v535
        %537 = vdwg.mxu0
        %538 = vmatpush.msra.mxu0 %v510
        %539 = vmatpush.msra.mxu0 %v508
        %540 = vmatpush.msra.mxu0 %v506
        %541 = vmatpush.msra.mxu0 %v504
        %542 = vmatpush.msra.mxu0 %v502
        %543 = vmatpush.msra.mxu0 %v500
        %544 = vmatpush.msra.mxu0 %v498
        %545 = vmatpush.msra.mxu0 %v496
        %546 = vmatpush.msra.mxu0 %v494
        %547 = vmatpush.msra.mxu0 %v492
        %548 = vmatpush.msra.mxu0 %v490
        %549 = vmatpush.msra.mxu0 %v488
        %550 = vmatpush.msra.mxu0 %v486
        %551 = vmatpush.msra.mxu0 %v484
        %552 = vmatpush.msra.mxu0 %v482
        %553 = vmatpush.msra.mxu0 %v480
        %554 = vmatmul.f32.gmra.mxu0 %v477
        %v555 = vpop.f32.mrf.mxu0
        %v556 = vadd.f32 %v515, %v555
        %557 = vdwg.mxu0
        %v558 = vtanh.pop %v536
        %v559 = vmul.f32 %v558, 1.442695
        %v560 = vpow.pop %v559
        %v561 = vmul.f32 %v309, %v560
        %v562 = vadd.f32 %v561, %v556
        %s563 = scalar_lea.vmem [#allocation5], 256
        %v564 = vld [vmem:[%s563] sm:$0xff]
        %v565 = vld [vmem:[%s563 + $0x8] sm:$0xff]
        %v566 = vld [vmem:[%s563 + $0x10] sm:$0xff]
        %v567 = vld [vmem:[%s563 + $0x18] sm:$0xff]
        %v568 = vld [vmem:[%s563 + $0x20] sm:$0xff]
        %v569 = vld [vmem:[%s563 + $0x28] sm:$0xff]
        %v570 = vld [vmem:[%s563 + $0x30] sm:$0xff]
        %v571 = vld [vmem:[%s563 + $0x38] sm:$0xff]
        %v572 = vld [vmem:[%s563 + $0x40] sm:$0xff]
        %v573 = vld [vmem:[%s563 + $0x48] sm:$0xff]
        %v574 = vld [vmem:[%s563 + $0x50] sm:$0xff]
        %v575 = vld [vmem:[%s563 + $0x58] sm:$0xff]
        %v576 = vld [vmem:[%s563 + $0x60] sm:$0xff]
        %v577 = vld [vmem:[%s563 + $0x68] sm:$0xff]
        %v578 = vld [vmem:[%s563 + $0x70] sm:$0xff]
        %v579 = vld [vmem:[%s563 + $0x78] sm:$0xff]
        %s580 = scalar_lea.vmem [#allocation7], 2
        %v581 = vld [vmem:[%s580] sm:$0x1]
        %v583 = vperm.slane %v581, 0
        %585 = vmatpush.msra.mxu0 %v579
        %586 = vmatpush.msra.mxu0 %v578
        %587 = vmatpush.msra.mxu0 %v577
        %588 = vmatpush.msra.mxu0 %v576
        %589 = vmatpush.msra.mxu0 %v575
        %590 = vmatpush.msra.mxu0 %v574
        %591 = vmatpush.msra.mxu0 %v573
        %592 = vmatpush.msra.mxu0 %v572
        %593 = vmatpush.msra.mxu0 %v571
        %594 = vmatpush.msra.mxu0 %v570
        %595 = vmatpush.msra.mxu0 %v569
        %596 = vmatpush.msra.mxu0 %v568
        %597 = vmatpush.msra.mxu0 %v567
        %598 = vmatpush.msra.mxu0 %v566
        %599 = vmatpush.msra.mxu0 %v565
        %600 = vmatpush.msra.mxu0 %v564
        %601 = vmatmul.f32.gmra.mxu0 %v562
        %v602 = vpop.f32.mrf.mxu0
        %v603 = vadd.f32 %v583, %v602
        %604 = vdwg.mxu0
        %v605 = vtanh.pop %v603
        %s606 = scalar_lea.vmem [#allocation8], 512
        %v607 = vld [vmem:[%s606] sm:$0xff]
        %v608 = vld [vmem:[%s606 + $0x8] sm:$0xff]
        %v609 = vld [vmem:[%s606 + $0x10] sm:$0xff]
        %v610 = vld [vmem:[%s606 + $0x18] sm:$0xff]
        %v611 = vld [vmem:[%s606 + $0x20] sm:$0xff]
        %v612 = vld [vmem:[%s606 + $0x28] sm:$0xff]
        %v613 = vld [vmem:[%s606 + $0x30] sm:$0xff]
        %v614 = vld [vmem:[%s606 + $0x38] sm:$0xff]
        %v615 = vld [vmem:[%s606 + $0x40] sm:$0xff]
        %v616 = vld [vmem:[%s606 + $0x48] sm:$0xff]
        %v617 = vld [vmem:[%s606 + $0x50] sm:$0xff]
        %v618 = vld [vmem:[%s606 + $0x58] sm:$0xff]
        %v619 = vld [vmem:[%s606 + $0x60] sm:$0xff]
        %v620 = vld [vmem:[%s606 + $0x68] sm:$0xff]
        %v621 = vld [vmem:[%s606 + $0x70] sm:$0xff]
        %v622 = vld [vmem:[%s606 + $0x78] sm:$0xff]
        %v623 = vld [vmem:[%s606 + $0x80] sm:$0xff]
        %v624 = vld [vmem:[%s606 + $0x88] sm:$0xff]
        %v625 = vld [vmem:[%s606 + $0x90] sm:$0xff]
        %v626 = vld [vmem:[%s606 + $0x98] sm:$0xff]
        %v627 = vld [vmem:[%s606 + $0xa0] sm:$0xff]
        %v628 = vld [vmem:[%s606 + $0xa8] sm:$0xff]
        %v629 = vld [vmem:[%s606 + $0xb0] sm:$0xff]
        %v630 = vld [vmem:[%s606 + $0xb8] sm:$0xff]
        %v631 = vld [vmem:[%s606 + $0xc0] sm:$0xff]
        %v632 = vld [vmem:[%s606 + $0xc8] sm:$0xff]
        %v633 = vld [vmem:[%s606 + $0xd0] sm:$0xff]
        %v634 = vld [vmem:[%s606 + $0xd8] sm:$0xff]
        %v635 = vld [vmem:[%s606 + $0xe0] sm:$0xff]
        %v636 = vld [vmem:[%s606 + $0xe8] sm:$0xff]
        %v637 = vld [vmem:[%s606 + $0xf0] sm:$0xff]
        %v638 = vld [vmem:[%s606 + $0xf8] sm:$0xff]
        %s639 = scalar_lea.vmem [#allocation10], 4
        %v640 = vld [vmem:[%s639] sm:$0x3]
        %v642 = vperm.slane %v640, 0
        %v643 = vperm.slane %v640, 1
        %646 = vmatpush.msra.mxu0 %v637
        %647 = vmatpush.msra.mxu0 %v635
        %648 = vmatpush.msra.mxu0 %v633
        %649 = vmatpush.msra.mxu0 %v631
        %650 = vmatpush.msra.mxu0 %v629
        %651 = vmatpush.msra.mxu0 %v627
        %652 = vmatpush.msra.mxu0 %v625
        %653 = vmatpush.msra.mxu0 %v623
        %654 = vmatpush.msra.mxu0 %v621
        %655 = vmatpush.msra.mxu0 %v619
        %656 = vmatpush.msra.mxu0 %v617
        %657 = vmatpush.msra.mxu0 %v615
        %658 = vmatpush.msra.mxu0 %v613
        %659 = vmatpush.msra.mxu0 %v611
        %660 = vmatpush.msra.mxu0 %v609
        %661 = vmatpush.msra.mxu0 %v607
        %662 = vmatmul.f32.gmra.mxu0 %v605
        %v663 = vpop.f32.mrf.mxu0
        %v664 = vadd.f32 %v642, %v663
        %665 = vdwg.mxu0
        %666 = vmatpush.msra.mxu0 %v638
        %667 = vmatpush.msra.mxu0 %v636
        %668 = vmatpush.msra.mxu0 %v634
        %669 = vmatpush.msra.mxu0 %v632
        %670 = vmatpush.msra.mxu0 %v630
        %671 = vmatpush.msra.mxu0 %v628
        %672 = vmatpush.msra.mxu0 %v626
        %673 = vmatpush.msra.mxu0 %v624
        %674 = vmatpush.msra.mxu0 %v622
        %675 = vmatpush.msra.mxu0 %v620
        %676 = vmatpush.msra.mxu0 %v618
        %677 = vmatpush.msra.mxu0 %v616
        %678 = vmatpush.msra.mxu0 %v614
        %679 = vmatpush.msra.mxu0 %v612
        %680 = vmatpush.msra.mxu0 %v610
        %681 = vmatpush.msra.mxu0 %v608
        %682 = vmatmul.f32.gmra.mxu0 %v605
        %v683 = vpop.f32.mrf.mxu0
        %v684 = vadd.f32 %v643, %v683
        %685 = vdwg.mxu0
        %v686 = vtanh.pop %v664
        %v687 = vmul.f32 %v686, 1.442695
        %v688 = vpow.pop %v687
        %v689 = vmul.f32 %v434, %v688
        %v690 = vadd.f32 %v689, %v684
        %s691 = scalar_lea.vmem [#allocation5], 384
        %v692 = vld [vmem:[%s691] sm:$0xff]
        %v693 = vld [vmem:[%s691 + $0x8] sm:$0xff]
        %v694 = vld [vmem:[%s691 + $0x10] sm:$0xff]
        %v695 = vld [vmem:[%s691 + $0x18] sm:$0xff]
        %v696 = vld [vmem:[%s691 + $0x20] sm:$0xff]
        %v697 = vld [vmem:[%s691 + $0x28] sm:$0xff]
        %v698 = vld [vmem:[%s691 + $0x30] sm:$0xff]
        %v699 = vld [vmem:[%s691 + $0x38] sm:$0xff]
        %v700 = vld [vmem:[%s691 + $0x40] sm:$0xff]
        %v701 = vld [vmem:[%s691 + $0x48] sm:$0xff]
        %v702 = vld [vmem:[%s691 + $0x50] sm:$0xff]
        %v703 = vld [vmem:[%s691 + $0x58] sm:$0xff]
        %v704 = vld [vmem:[%s691 + $0x60] sm:$0xff]
        %v705 = vld [vmem:[%s691 + $0x68] sm:$0xff]
        %v706 = vld [vmem:[%s691 + $0x70] sm:$0xff]
        %v707 = vld [vmem:[%s691 + $0x78] sm:$0xff]
        %s708 = scalar_lea.vmem [#allocation7], 3
        %v709 = vld [vmem:[%s708] sm:$0x1]
        %v711 = vperm.slane %v709, 0
        %713 = vmatpush.msra.mxu0 %v707
        %714 = vmatpush.msra.mxu0 %v706
        %715 = vmatpush.msra.mxu0 %v705
        %716 = vmatpush.msra.mxu0 %v704
        %717 = vmatpush.msra.mxu0 %v703
        %718 = vmatpush.msra.mxu0 %v702
        %719 = vmatpush.msra.mxu0 %v701
        %720 = vmatpush.msra.mxu0 %v700
        %721 = vmatpush.msra.mxu0 %v699
        %722 = vmatpush.msra.mxu0 %v698
        %723 = vmatpush.msra.mxu0 %v697
        %724 = vmatpush.msra.mxu0 %v696
        %725 = vmatpush.msra.mxu0 %v695
        %726 = vmatpush.msra.mxu0 %v694
        %727 = vmatpush.msra.mxu0 %v693
        %728 = vmatpush.msra.mxu0 %v692
        %729 = vmatmul.f32.gmra.mxu0 %v690
        %v730 = vpop.f32.mrf.mxu0
        %v731 = vadd.f32 %v711, %v730
        %732 = vdwg.mxu0
        %v733 = vtanh.pop %v731
        %s734 = scalar_lea.vmem [#allocation8], 768
        %v735 = vld [vmem:[%s734] sm:$0xff]
        %v736 = vld [vmem:[%s734 + $0x8] sm:$0xff]
        %v737 = vld [vmem:[%s734 + $0x10] sm:$0xff]
        %v738 = vld [vmem:[%s734 + $0x18] sm:$0xff]
        %v739 = vld [vmem:[%s734 + $0x20] sm:$0xff]
        %v740 = vld [vmem:[%s734 + $0x28] sm:$0xff]
        %v741 = vld [vmem:[%s734 + $0x30] sm:$0xff]
        %v742 = vld [vmem:[%s734 + $0x38] sm:$0xff]
        %v743 = vld [vmem:[%s734 + $0x40] sm:$0xff]
        %v744 = vld [vmem:[%s734 + $0x48] sm:$0xff]
        %v745 = vld [vmem:[%s734 + $0x50] sm:$0xff]
        %v746 = vld [vmem:[%s734 + $0x58] sm:$0xff]
        %v747 = vld [vmem:[%s734 + $0x60] sm:$0xff]
        %v748 = vld [vmem:[%s734 + $0x68] sm:$0xff]
        %v749 = vld [vmem:[%s734 + $0x70] sm:$0xff]
        %v750 = vld [vmem:[%s734 + $0x78] sm:$0xff]
        %v751 = vld [vmem:[%s734 + $0x80] sm:$0xff]
        %v752 = vld [vmem:[%s734 + $0x88] sm:$0xff]
        %v753 = vld [vmem:[%s734 + $0x90] sm:$0xff]
        %v754 = vld [vmem:[%s734 + $0x98] sm:$0xff]
        %v755 = vld [vmem:[%s734 + $0xa0] sm:$0xff]
        %v756 = vld [vmem:[%s734 + $0xa8] sm:$0xff]
        %v757 = vld [vmem:[%s734 + $0xb0] sm:$0xff]
        %v758 = vld [vmem:[%s734 + $0xb8] sm:$0xff]
        %v759 = vld [vmem:[%s734 + $0xc0] sm:$0xff]
        %v760 = vld [vmem:[%s734 + $0xc8] sm:$0xff]
        %v761 = vld [vmem:[%s734 + $0xd0] sm:$0xff]
        %v762 = vld [vmem:[%s734 + $0xd8] sm:$0xff]
        %v763 = vld [vmem:[%s734 + $0xe0] sm:$0xff]
        %v764 = vld [vmem:[%s734 + $0xe8] sm:$0xff]
        %v765 = vld [vmem:[%s734 + $0xf0] sm:$0xff]
        %v766 = vld [vmem:[%s734 + $0xf8] sm:$0xff]
        %s767 = scalar_lea.vmem [#allocation10], 6
        %v768 = vld [vmem:[%s767] sm:$0x3]
        %v770 = vperm.slane %v768, 0
        %v771 = vperm.slane %v768, 1
        %774 = vmatpush.msra.mxu0 %v765
        %775 = vmatpush.msra.mxu0 %v763
        %776 = vmatpush.msra.mxu0 %v761
        %777 = vmatpush.msra.mxu0 %v759
        %778 = vmatpush.msra.mxu0 %v757
        %779 = vmatpush.msra.mxu0 %v755
        %780 = vmatpush.msra.mxu0 %v753
        %781 = vmatpush.msra.mxu0 %v751
        %782 = vmatpush.msra.mxu0 %v749
        %783 = vmatpush.msra.mxu0 %v747
        %784 = vmatpush.msra.mxu0 %v745
        %785 = vmatpush.msra.mxu0 %v743
        %786 = vmatpush.msra.mxu0 %v741
        %787 = vmatpush.msra.mxu0 %v739
        %788 = vmatpush.msra.mxu0 %v737
        %789 = vmatpush.msra.mxu0 %v735
        %790 = vmatmul.f32.gmra.mxu0 %v733
        %v791 = vpop.f32.mrf.mxu0
        %v792 = vadd.f32 %v770, %v791
        %793 = vdwg.mxu0
        %794 = vmatpush.msra.mxu0 %v766
        %795 = vmatpush.msra.mxu0 %v764
        %796 = vmatpush.msra.mxu0 %v762
        %797 = vmatpush.msra.mxu0 %v760
        %798 = vmatpush.msra.mxu0 %v758
        %799 = vmatpush.msra.mxu0 %v756
        %800 = vmatpush.msra.mxu0 %v754
        %801 = vmatpush.msra.mxu0 %v752
        %802 = vmatpush.msra.mxu0 %v750
        %803 = vmatpush.msra.mxu0 %v748
        %804 = vmatpush.msra.mxu0 %v746
        %805 = vmatpush.msra.mxu0 %v744
        %806 = vmatpush.msra.mxu0 %v742
        %807 = vmatpush.msra.mxu0 %v740
        %808 = vmatpush.msra.mxu0 %v738
        %809 = vmatpush.msra.mxu0 %v736
        %810 = vmatmul.f32.gmra.mxu0 %v733
        %v811 = vpop.f32.mrf.mxu0
        %v812 = vadd.f32 %v771, %v811
        %813 = vdwg.mxu0
        %v814 = vtanh.pop %v792
        %v815 = vmul.f32 %v814, 1.442695
        %v816 = vpow.pop %v815
        %v817 = vmul.f32 %v562, %v816
        %v818 = vadd.f32 %v817, %v812
        %819 = vst [vmem:[%s308] sm:$0xff] %v818
        %820 = vst [vmem:[%s308 + $0x8] sm:$0xff] %v690
        %s821 = sand.u32 %s142, 1
        %s822 = scalar_lea.sflag [#allocation4], %s821
        %s823 = sand.u32 %s142, 1
        %s824 = smul.addr %s823, 16
        %s825 = scalar_lea.vmem [#allocation11], %s824
        // Predicated region
        $region61: #{tpu_custom_call.1} parent=39 // pred_check
          %p826 = pneg %p152
        $region62: #{tpu_custom_call.1} parent=39 // pred_check_branch
          %828 = sbr.rel (%p826) target = $region64
        $region63: #{tpu_custom_call.1} parent=39 // pred_region
          %830 = vsyncadd %s822, 0
          %s831 = smul.addr %s24, 2
          %s832 = smul.addr %s831, 8
          %s833 = scalar_lea.hbm %s5, %s832
          %s835 = sshll.u32 %s825, 4
          %s836 = int_to_ptr.vmem [resolvable:$true] %s835
          %s837 = sshll.u32 %s833, 4
          %s838 = int_to_ptr.hbm [resolvable:$true] %s837
          %840 = dma.vmem_to_hbm [thread:$0]  %s836, 256, %s838, %s822
        $region64: #{tpu_custom_call.1} parent=39 // pred_fallthru
          _
      $region40: #{tpu_custom_call.1} parent=5 // pred_fallthru
        _
      %p841 = scmp.le.s32.totalorder 2, %s19
      // Predicated region
      $region65: #{tpu_custom_call.1} parent=5 // pred_check
        %p842 = pneg %p841
      $region66: #{tpu_custom_call.1} parent=5 // pred_check_branch
        %844 = sbr.rel (%p842) target = $region68
      $region67: #{tpu_custom_call.1} parent=5 // pred_region
        %s845 = ssub.s32 %s19, 2
        // Predicated region
        $region69: #{tpu_custom_call.1} parent=67 // pred_check
          %p846 = pneg %p158
        $region70: #{tpu_custom_call.1} parent=67 // pred_check_branch
          %848 = sbr.rel (%p846) target = $region72
        $region71: #{tpu_custom_call.1} parent=67 // pred_region
          %s849 = sand.u32 %s143, 1
          %s850 = scalar_lea.sflag [#allocation4], %s849
          %s851 = sand.u32 %s143, 1
          %s852 = smul.addr %s851, 16
          %s853 = scalar_lea.vmem [#allocation11], %s852
          %855 = dma.done %s850, 256
        $region72: #{tpu_custom_call.1} parent=67 // pred_fallthru
          _
      $region68: #{tpu_custom_call.1} parent=5 // pred_fallthru
        _
    $region6: #{tpu_custom_call.1} parent=1 // loop_footer
      %s23 = sadd.s32 1, %s19
    $region7: #{tpu_custom_call.1} parent=1 // loop_footer_branch
      %18 = sbr.rel target = $region3
    $region8: #{tpu_custom_call.1} parent=1 // loop_exit
      _
    %856 = vsyncpa [#allocation3], 1
    %s857 = scalar_lea.sflag [#allocation3], 1
    %858 = vsyncpa %s857, 1
    %859 = vsyncpa [#allocation6], 1
    %860 = vsyncpa [#allocation9], 1
    %861 = vsyncpa [#allocation4], 1
    %s862 = scalar_lea.sflag [#allocation4], 1
    %863 = vsyncpa %s862, 1

</llo_original>
